<compile_context>
chip_gen: v7x
topology: tpu7x:2x2x1
jax: 0.10.0
libtpu: 0.0.40
codegen_flags: <defaults>
</compile_context>

<pallas_src>
import functools

import jax
import jax.numpy as jnp
from jax.experimental import pallas as pl
from jax.experimental.pallas import tpu as pltpu


def _contrastive_loss_kernel(anc_ref, pos_ref, neg_ref, out_ref, *,
                             inv_t, batch, tile_b):
    i = pl.program_id(0)

    @pl.when(i == 0)
    def _init():
        out_ref[0, 0] = 0.0

    a = anc_ref[...].astype(jnp.float32)          # (TILE_B, D)
    p = pos_ref[...].astype(jnp.float32)          # (TILE_B, D)
    n = neg_ref[...].astype(jnp.float32)          # (TILE_B, D)

    # CE([l_pos, l_neg]/t, label=0) = log(1 + exp((l_neg - l_pos)/t))
    # fused single reduction: l_neg - l_pos = <a, n - p>
    d = jnp.sum(a * (n - p), axis=1, keepdims=True) * inv_t      # (TILE_B, 1)
    # numerically stable softplus
    losses = jnp.maximum(d, 0.0) + jnp.log(1.0 + jnp.exp(-jnp.abs(d)))

    # mask rows that are pure batch padding
    rows = i * tile_b + jax.lax.broadcasted_iota(jnp.int32, (tile_b, 1), 0)
    losses = jnp.where(rows < batch, losses, 0.0)

    out_ref[0, 0] += jnp.sum(losses)

    @pl.when(i == pl.num_programs(0) - 1)
    def _finalize():
        out_ref[0, 0] = out_ref[0, 0] * (1.0 / batch)


def _round_up(x, m):
    return ((x + m - 1) // m) * m


def _choose_tile_b(b, d, itemsize):
    """Largest batch tile s.t. 3 inputs x 2 pipeline buffers stay ~<=12 MiB."""
    sub = max(8, 32 // itemsize)                  # sublane granule (f32:8, bf16:16)
    budget = 12 * 1024 * 1024                     # safe on v5e/v6e/v7x defaults
    max_rows = max(sub, budget // (6 * d * itemsize))
    tile = int(min(512, max_rows, _round_up(b, sub)))
    return max(sub, (tile // sub) * sub)


def contrastive_loss(anc, pos, neg, *, nce_t=0.07, tile_b=None):
    """anc/pos/neg: [B, ...] arrays (flattened to [B, D]). Returns scalar loss."""
    bs = anc.shape[0]
    a = anc.reshape(bs, -1)
    p = pos.reshape(bs, -1)
    n = neg.reshape(bs, -1)
    d = a.shape[1]
    itemsize = jnp.dtype(a.dtype).itemsize

    if tile_b is None:
        tile_b = _choose_tile_b(bs, d, itemsize)
    b_pad = _round_up(bs, tile_b)
    if b_pad != bs:
        pad = ((0, b_pad - bs), (0, 0))
        a = jnp.pad(a, pad)
        p = jnp.pad(p, pad)
        n = jnp.pad(n, pad)
    num_tiles = b_pad // tile_b

    kernel = functools.partial(
        _contrastive_loss_kernel,
        inv_t=1.0 / float(nce_t), batch=int(bs), tile_b=int(tile_b))

    out = pl.pallas_call(
        kernel,
        out_shape=jax.ShapeDtypeStruct((1, 1), jnp.float32),
        grid=(num_tiles,),
        in_specs=[
            pl.BlockSpec((tile_b, d), lambda i: (i, 0)),
            pl.BlockSpec((tile_b, d), lambda i: (i, 0)),
            pl.BlockSpec((tile_b, d), lambda i: (i, 0)),
        ],
        out_specs=pl.BlockSpec(memory_space=pltpu.MemorySpace.SMEM),
        compiler_params=pltpu.CompilerParams(
            dimension_semantics=("arbitrary",),      # batch axis carries the accumulator
            vmem_limit_bytes=32 * 1024 * 1024),
    )(a, p, n)
    return out[0, 0]


def contrastive_loss_ref(anc, pos, neg, nce_t=0.07):
    """Pure-JAX reference mirroring the PyTorch module."""
    bs = anc.shape[0]
    a = anc.reshape(bs, -1).astype(jnp.float32)
    p = pos.reshape(bs, -1).astype(jnp.float32)
    n = neg.reshape(bs, -1).astype(jnp.float32)
    l_pos = jnp.sum(a * p, axis=1)
    l_neg = jnp.sum(a * n, axis=1)
    logits = jnp.stack([l_pos, l_neg], axis=1) / nce_t
    m = jnp.max(logits, axis=1)
    logz = m + jnp.log(jnp.sum(jnp.exp(logits - m[:, None]), axis=1))
    loss = logz - logits[:, 0]                       # CE with label 0, reduction='none'
    return loss.mean()


if __name__ == "__main__":
    key = jax.random.PRNGKey(0)
    B, C, H, W = 8, 4, 16, 16                        # D = C*H*W = 1024 (lane-dense)

    def make(k, shape):
        x = jax.random.normal(k, shape, jnp.float32)
        flat = x.reshape(shape[0], -1)
        flat = flat / jnp.linalg.norm(flat, axis=1, keepdims=True)
        return flat.reshape(shape)

    ka, kp, kn = jax.random.split(key, 3)
    anc = make(ka, (B, C, H, W))
    pos = make(kp, (B, C, H, W))
    neg = make(kn, (B, C, H, W))

    ok = True

    # f32, whole batch in one tile
    out = contrastive_loss(anc, pos, neg)
    jax.block_until_ready(out)
    ref = contrastive_loss_ref(anc, pos, neg)
    ok = ok and bool(jnp.allclose(out, ref, rtol=1e-4, atol=1e-4))

    # ragged batch: exercises padding mask + multi-step scalar accumulation
    B2 = 13
    anc2 = make(jax.random.fold_in(key, 1), (B2, C * H * W))
    pos2 = make(jax.random.fold_in(key, 2), (B2, C * H * W))
    neg2 = make(jax.random.fold_in(key, 3), (B2, C * H * W))
    out2 = contrastive_loss(anc2, pos2, neg2, tile_b=8)
    jax.block_until_ready(out2)
    ref2 = contrastive_loss_ref(anc2, pos2, neg2)
    ok = ok and bool(jnp.allclose(out2, ref2, rtol=1e-4, atol=1e-4))

    # bf16 streaming: inputs stay bf16 in HBM, upcast happens in-kernel
    out3 = contrastive_loss(anc.astype(jnp.bfloat16), pos.astype(jnp.bfloat16),
                            neg.astype(jnp.bfloat16))
    jax.block_until_ready(out3)
    ref3 = contrastive_loss_ref(anc.astype(jnp.bfloat16), pos.astype(jnp.bfloat16),
                                neg.astype(jnp.bfloat16))
    ok = ok and bool(jnp.allclose(out3, ref3, rtol=1e-3, atol=1e-3))

    if ok:
        print("KERNEL_OK")
</pallas_src>

<mosaic_0001>
module attributes {stable_mosaic.version = 11 : i64} {
  func.func @_contrastive_loss_kernel(%arg0: i32, %arg1: memref<8x1024xf32, #tpu.memory_space<vmem>>, %arg2: memref<8x1024xf32, #tpu.memory_space<vmem>>, %arg3: memref<8x1024xf32, #tpu.memory_space<vmem>>, %arg4: memref<1x1xf32, #tpu.memory_space<smem>>) attributes {dimension_semantics = [#tpu.dimension_semantics<arbitrary>], iteration_bounds = array<i64: 1>, scalar_prefetch = 0 : i64, scratch_operands = 0 : i64, tpu.core_type = #tpu.core_type<tc>, window_params = [{transform_indices = @transform_0, window_bounds = array<i64: 8, 1024>}, {transform_indices = @transform_1, window_bounds = array<i64: 8, 1024>}, {transform_indices = @transform_2, window_bounds = array<i64: 8, 1024>}, {transform_indices = @transform_3, window_bounds = array<i64: 1, 1>}]} {
    %c0_i32 = arith.constant 0 : i32
    %0 = arith.cmpi eq, %arg0, %c0_i32 : i32
    %1 = arith.extui %0 : i1 to i32
    %c0_i32_0 = arith.constant 0 : i32
    %2 = arith.cmpi ne, %1, %c0_i32_0 : i32
    scf.if %2 {
      %cst_19 = arith.constant 0.000000e+00 : f32
      %c0_20 = arith.constant 0 : index
      %c0_21 = arith.constant 0 : index
      %40 = memref.load %arg4[%c0_20, %c0_21] : memref<1x1xf32, #tpu.memory_space<smem>>
      memref.store %cst_19, %arg4[%c0_20, %c0_21] : memref<1x1xf32, #tpu.memory_space<smem>>
    } else {
    }
    %c0 = arith.constant 0 : index
    %c0_1 = arith.constant 0 : index
    %3 = vector.load %arg1[%c0, %c0_1] : memref<8x1024xf32, #tpu.memory_space<vmem>>, vector<8x1024xf32>
    %c0_2 = arith.constant 0 : index
    %c0_3 = arith.constant 0 : index
    %4 = vector.load %arg2[%c0_2, %c0_3] : memref<8x1024xf32, #tpu.memory_space<vmem>>, vector<8x1024xf32>
    %c0_4 = arith.constant 0 : index
    %c0_5 = arith.constant 0 : index
    %5 = vector.load %arg3[%c0_4, %c0_5] : memref<8x1024xf32, #tpu.memory_space<vmem>>, vector<8x1024xf32>
    %6 = arith.subf %5, %4 : vector<8x1024xf32>
    %7 = arith.mulf %3, %6 : vector<8x1024xf32>
    %cst = arith.constant dense<0.000000e+00> : vector<8xf32>
    %8 = vector.multi_reduction <add>, %7, %cst [1] : vector<8x1024xf32> to vector<8xf32>
    %9 = vector.shape_cast %8 : vector<8xf32> to vector<8x1xf32>
    %cst_6 = arith.constant 14.2857141 : f32
    %10 = vector.broadcast %cst_6 : f32 to vector<8x1xf32>
    %11 = arith.mulf %9, %10 : vector<8x1xf32>
    %cst_7 = arith.constant 0.000000e+00 : f32
    %12 = vector.broadcast %cst_7 : f32 to vector<8x1xf32>
    %13 = arith.maximumf %11, %12 : vector<8x1xf32>
    %14 = math.absf %11 : vector<8x1xf32>
    %cst_8 = arith.constant 0.000000e+00 : f32
    %15 = vector.broadcast %cst_8 : f32 to vector<8x1xf32>
    %16 = arith.subf %15, %14 : vector<8x1xf32>
    %17 = math.exp %16 : vector<8x1xf32>
    %cst_9 = arith.constant 1.000000e+00 : f32
    %18 = vector.broadcast %cst_9 : f32 to vector<8x1xf32>
    %19 = arith.addf %18, %17 : vector<8x1xf32>
    %20 = math.log %19 : vector<8x1xf32>
    %21 = arith.addf %13, %20 : vector<8x1xf32>
    %c8_i32 = arith.constant 8 : i32
    %22 = arith.muli %arg0, %c8_i32 : i32
    %23 = tpu.iota {dimensions = array<i32: 0>} : vector<8x1xi32>
    %24 = vector.broadcast %22 : i32 to vector<8x1xi32>
    %25 = arith.addi %24, %23 : vector<8x1xi32>
    %c8_i32_10 = arith.constant 8 : i32
    %26 = vector.broadcast %c8_i32_10 : i32 to vector<8x1xi32>
    %27 = arith.cmpi slt, %25, %26 : vector<8x1xi32>
    %cst_11 = arith.constant 0.000000e+00 : f32
    %28 = vector.broadcast %cst_11 : f32 to vector<8x1xf32>
    %29 = arith.select %27, %21, %28 : vector<8x1xi1>, vector<8x1xf32>
    %c0_12 = arith.constant 0 : index
    %c0_13 = arith.constant 0 : index
    %30 = memref.load %arg4[%c0_12, %c0_13] : memref<1x1xf32, #tpu.memory_space<smem>>
    %31 = vector.shape_cast %29 : vector<8x1xf32> to vector<1x8x1xf32>
    %cst_14 = arith.constant dense<0.000000e+00> : vector<1xf32>
    %32 = vector.multi_reduction <add>, %31, %cst_14 [1, 2] : vector<1x8x1xf32> to vector<1xf32>
    %33 = vector.shape_cast %32 : vector<1xf32> to vector<1x1x1xf32>
    %34 = vector.extract %33[0, 0, 0] : f32 from vector<1x1x1xf32>
    %35 = arith.addf %30, %34 : f32
    %c0_15 = arith.constant 0 : index
    %c0_16 = arith.constant 0 : index
    %36 = memref.load %arg4[%c0_15, %c0_16] : memref<1x1xf32, #tpu.memory_space<smem>>
    memref.store %35, %arg4[%c0_15, %c0_16] : memref<1x1xf32, #tpu.memory_space<smem>>
    %c0_i32_17 = arith.constant 0 : i32
    %37 = arith.cmpi eq, %arg0, %c0_i32_17 : i32
    %38 = arith.extui %37 : i1 to i32
    %c0_i32_18 = arith.constant 0 : i32
    %39 = arith.cmpi ne, %38, %c0_i32_18 : i32
    scf.if %39 {
      %c0_19 = arith.constant 0 : index
      %c0_20 = arith.constant 0 : index
      %40 = memref.load %arg4[%c0_19, %c0_20] : memref<1x1xf32, #tpu.memory_space<smem>>
      %cst_21 = arith.constant 1.250000e-01 : f32
      %41 = arith.mulf %40, %cst_21 : f32
      %c0_22 = arith.constant 0 : index
      %c0_23 = arith.constant 0 : index
      %42 = memref.load %arg4[%c0_22, %c0_23] : memref<1x1xf32, #tpu.memory_space<smem>>
      memref.store %41, %arg4[%c0_22, %c0_23] : memref<1x1xf32, #tpu.memory_space<smem>>
    } else {
    }
    return
  }
  func.func @transform_0(%arg0: i32) -> (i32, i32) {
    %c0_i32 = arith.constant 0 : i32
    %c0_i32_0 = arith.constant 0 : i32
    return %arg0, %c0_i32 : i32, i32
  }
  func.func @transform_1(%arg0: i32) -> (i32, i32) {
    %c0_i32 = arith.constant 0 : i32
    %c0_i32_0 = arith.constant 0 : i32
    return %arg0, %c0_i32 : i32, i32
  }
  func.func @transform_2(%arg0: i32) -> (i32, i32) {
    %c0_i32 = arith.constant 0 : i32
    %c0_i32_0 = arith.constant 0 : i32
    return %arg0, %c0_i32 : i32, i32
  }
  func.func @transform_3(%arg0: i32) -> (i32, i32) {
    %c0_i32 = arith.constant 0 : i32
    %c0_i32_0 = arith.constant 0 : i32
    %c0_i32_1 = arith.constant 0 : i32
    return %c0_i32, %c0_i32_0 : i32, i32
  }
}

</mosaic_0001>

<llo_original>
// kernel: tpu_custom_call.1
$region0: #{tpu_custom_call.1}
  #allocation0 [shape = 'u32[]', space=smem, size = 0x4, offset = 0x4, fixed_abs, tag = 'smem constant byte address 0x4 - core index']
  #allocation1 [shape = 'u32[144,128]{1,0:T(1,128)}', space=vmem, size = 0x12000, scoped, tag = 'internal scratch']
  %s0 = inlined_call_operand.hbm [shape: f32[8,1024], index: 0, kind: input, shape index: {}]
  %s1 = inlined_call_operand.hbm [shape: f32[8,1024], index: 1, kind: input, shape index: {}]
  %s2 = inlined_call_operand.hbm [shape: f32[8,1024], index: 2, kind: input, shape index: {}]
  %s3 = inlined_call_operand.hbm [shape: f32[1,1], index: 3, kind: output, shape index: {}]
  %s4 = sld [smem:[#allocation0]]
  $region42: #{tpu_custom_call.1} parent=0
    _
  %s6 = ssub.s32 1, %s4
  %s7 = scalar_select 0, %s6, %s4
  $region1: #{tpu_custom_call.1} parent=0
    #allocation2 [shape = 'u8[32768]{0}', space=vmem, size = 0x8000, scoped, tag = 'input window, operand 0, single buffered']
    #allocation3 [shape = 's32[1]{0}', space=sflag, size = 0x4, scoped, tag = 'scoped memory for tpu_custom_call.1']
    #allocation4 [shape = 's32[1]{0}', space=sflag, size = 0x4, scoped, tag = 'scoped memory for tpu_custom_call.1']
    #allocation5 [shape = 'u8[32768]{0}', space=vmem, size = 0x8000, scoped, tag = 'input window, operand 1, single buffered']
    #allocation6 [shape = 's32[1]{0}', space=sflag, size = 0x4, scoped, tag = 'scoped memory for tpu_custom_call.1']
    #allocation7 [shape = 'u8[32768]{0}', space=vmem, size = 0x8000, scoped, tag = 'input window, operand 2, single buffered']
    #allocation8 [shape = 'u8[512]{0}', space=smem, size = 0x200, scoped, tag = 'output window, operand 0, single buffered']
    %8 = vsyncpa [#allocation3], 0
    %9 = vsyncpa [#allocation6], 0
    %10 = vsyncpa [#allocation4], 0
    // Predicated region
    $region2: #{tpu_custom_call.1} parent=1 // pred_check
      _
    $region3: #{tpu_custom_call.1} parent=1 // pred_check_branch
      %12 = sbr.rel (0) target = $region5
    $region4: #{tpu_custom_call.1} parent=1 // pred_region
      %s14 = ssub.s32 1024, 1024
      %15 = vsyncadd [#allocation3], %s14
      %s17 = sshll.u32 [#allocation2], 4
      %s18 = int_to_ptr.vmem [resolvable:$true] %s17
      %20 = dma.hbm_to_vmem [thread:$0]  %s0, 1024, %s18, [#allocation3]
    $region5: #{tpu_custom_call.1} parent=1 // pred_fallthru
      _
    // Predicated region
    $region6: #{tpu_custom_call.1} parent=1 // pred_check
      _
    $region7: #{tpu_custom_call.1} parent=1 // pred_check_branch
      %22 = sbr.rel (0) target = $region9
    $region8: #{tpu_custom_call.1} parent=1 // pred_region
      %s24 = ssub.s32 1024, 1024
      %25 = vsyncadd [#allocation6], %s24
      %s27 = sshll.u32 [#allocation5], 4
      %s28 = int_to_ptr.vmem [resolvable:$true] %s27
      %30 = dma.hbm_to_vmem [thread:$0]  %s1, 1024, %s28, [#allocation6]
    $region9: #{tpu_custom_call.1} parent=1 // pred_fallthru
      _
    // Predicated region
    $region10: #{tpu_custom_call.1} parent=1 // pred_check
      _
    $region11: #{tpu_custom_call.1} parent=1 // pred_check_branch
      %32 = sbr.rel (0) target = $region13
    $region12: #{tpu_custom_call.1} parent=1 // pred_region
      %s34 = ssub.s32 1024, 1024
      %35 = vsyncadd [#allocation6], %s34
      %s37 = sshll.u32 [#allocation7], 4
      %s38 = int_to_ptr.vmem [resolvable:$true] %s37
      %40 = dma.hbm_to_vmem [thread:$0]  %s2, 1024, %s38, [#allocation6]
    $region13: #{tpu_custom_call.1} parent=1 // pred_fallthru
      _
    // Predicated region
    $region14: #{tpu_custom_call.1} parent=1 // pred_check
      _
    $region15: #{tpu_custom_call.1} parent=1 // pred_check_branch
      %42 = sbr.rel (0) target = $region17
    $region16: #{tpu_custom_call.1} parent=1 // pred_region
      %43 = dma.done [#allocation3], 1024
    $region17: #{tpu_custom_call.1} parent=1 // pred_fallthru
      _
    // Predicated region
    $region18: #{tpu_custom_call.1} parent=1 // pred_check
      _
    $region19: #{tpu_custom_call.1} parent=1 // pred_check_branch
      %45 = sbr.rel (0) target = $region21
    $region20: #{tpu_custom_call.1} parent=1 // pred_region
      %46 = dma.done [#allocation6], 1024
    $region21: #{tpu_custom_call.1} parent=1 // pred_fallthru
      _
    // Predicated region
    $region22: #{tpu_custom_call.1} parent=1 // pred_check
      _
    $region23: #{tpu_custom_call.1} parent=1 // pred_check_branch
      %48 = sbr.rel (0) target = $region25
    $region24: #{tpu_custom_call.1} parent=1 // pred_region
      %49 = dma.done [#allocation6], 1024
    $region25: #{tpu_custom_call.1} parent=1 // pred_fallthru
      _
    %p50 = scmp.eq.s32.totalorder 0, 0
    // Predicated region
    $region26: #{tpu_custom_call.1} parent=1 // pred_check
      %p51 = pneg %p50
    $region27: #{tpu_custom_call.1} parent=1 // pred_check_branch
      %53 = sbr.rel (%p51) target = $region29
    $region28: #{tpu_custom_call.1} parent=1 // pred_region
      %s54 = scalar_lea.smem [#allocation8], 0
      %55 = sst [smem:[%s54]] 0.0
    $region29: #{tpu_custom_call.1} parent=1 // pred_fallthru
      _
    %v56 = vld [vmem:[#allocation2] sm:$0xff]
    %v57 = vld [vmem:[#allocation2 + $0x8] sm:$0xff]
    %v58 = vld [vmem:[#allocation2 + $0x10] sm:$0xff]
    %v59 = vld [vmem:[#allocation2 + $0x18] sm:$0xff]
    %v60 = vld [vmem:[#allocation2 + $0x20] sm:$0xff]
    %v61 = vld [vmem:[#allocation2 + $0x28] sm:$0xff]
    %v62 = vld [vmem:[#allocation2 + $0x30] sm:$0xff]
    %v63 = vld [vmem:[#allocation2 + $0x38] sm:$0xff]
    %v64 = vld [vmem:[#allocation5] sm:$0xff]
    %v65 = vld [vmem:[#allocation5 + $0x8] sm:$0xff]
    %v66 = vld [vmem:[#allocation5 + $0x10] sm:$0xff]
    %v67 = vld [vmem:[#allocation5 + $0x18] sm:$0xff]
    %v68 = vld [vmem:[#allocation5 + $0x20] sm:$0xff]
    %v69 = vld [vmem:[#allocation5 + $0x28] sm:$0xff]
    %v70 = vld [vmem:[#allocation5 + $0x30] sm:$0xff]
    %v71 = vld [vmem:[#allocation5 + $0x38] sm:$0xff]
    %v72 = vld [vmem:[#allocation7] sm:$0xff]
    %v73 = vld [vmem:[#allocation7 + $0x8] sm:$0xff]
    %v74 = vld [vmem:[#allocation7 + $0x10] sm:$0xff]
    %v75 = vld [vmem:[#allocation7 + $0x18] sm:$0xff]
    %v76 = vld [vmem:[#allocation7 + $0x20] sm:$0xff]
    %v77 = vld [vmem:[#allocation7 + $0x28] sm:$0xff]
    %v78 = vld [vmem:[#allocation7 + $0x30] sm:$0xff]
    %v79 = vld [vmem:[#allocation7 + $0x38] sm:$0xff]
    %v80 = vsub.f32 %v72, %v64
    %v81 = vsub.f32 %v73, %v65
    %v82 = vsub.f32 %v74, %v66
    %v83 = vsub.f32 %v75, %v67
    %v84 = vsub.f32 %v76, %v68
    %v85 = vsub.f32 %v77, %v69
    %v86 = vsub.f32 %v78, %v70
    %v87 = vsub.f32 %v79, %v71
    %v88 = vmul.f32 %v56, %v80
    %v89 = vmul.f32 %v57, %v81
    %v90 = vmul.f32 %v58, %v82
    %v91 = vmul.f32 %v59, %v83
    %v92 = vmul.f32 %v60, %v84
    %v93 = vmul.f32 %v61, %v85
    %v94 = vmul.f32 %v62, %v86
    %v95 = vmul.f32 %v63, %v87
    %v96 = vadd.f32 %v88, %v89
    %v97 = vadd.f32 %v96, %v90
    %v98 = vadd.f32 %v97, %v91
    %v99 = vadd.f32 %v98, %v92
    %v100 = vadd.f32 %v99, %v93
    %v101 = vadd.f32 %v100, %v94
    %v102 = vadd.f32 %v101, %v95
    %103 = vadd.xlane.f32.xlu0 %v102
    %v104 = vpop.xlane.xlu0 %103
    %v105 = vmul.f32 %v104, 14.285714
    %v106 = vmax.f32 %v105, 0.0
    %v107 = vand.u32 2147483647, %v105
    %v108 = vsub.f32 0.0, %v107
    %v109 = vmul.f32 %v108, 1.442695
    %v110 = vpow.pop %v109
    %v111 = vadd.f32 %v110, 1.0
    %v112 = vlog2.pop %v111
    %v113 = vmul.f32 %v112, 0.6931472
    %v114 = vadd.f32 %v106, %v113
    %s115 = smul.u32 0, 8
    %v116 = vlaneseq
    %v117 = vshrl.u32 %v116, 7
    %v118 = vstv %s115
    %v119 = vadd.s32 %v118, %v117
    %vm120 = vcmp.lt.s32.totalorder %v119, 8
    %v121 = vsel %vm120, %v114, 0.0
    %s122 = sld [smem:[#allocation8]]
    %vm123 = vcmask 7168
    %v124 = vsel %vm123, %v121, 0.0
    %125 = vadd.xlane.f32.xlu0 %v124
    %v126 = vpop.xlane.xlu0 %125
    %v127 = vrot.slane %v126, 4
    %v128 = vadd.f32 %v126, %v127
    %v129 = vrot.slane %v128, 2
    %v130 = vadd.f32 %v128, %v129
    %v131 = vrot.slane %v130, 1
    %v132 = vadd.f32 %v130, %v131
    %s133 = vtos %v132
    %s134 = sadd.f32 %s122, %s133
    %s135 = scalar_lea.smem [#allocation8], 0
    %136 = sst [smem:[%s135]] %s134
    // Predicated region
    $region30: #{tpu_custom_call.1} parent=1 // pred_check
      %p137 = pneg %p50
    $region31: #{tpu_custom_call.1} parent=1 // pred_check_branch
      %139 = sbr.rel (%p137) target = $region33
    $region32: #{tpu_custom_call.1} parent=1 // pred_region
      %s140 = sld [smem:[#allocation8]]
      %s141 = smul.f32 %s140, 0.125
      %142 = sst [smem:[%s135]] %s141
    $region33: #{tpu_custom_call.1} parent=1 // pred_fallthru
      _
    // Predicated region
    $region34: #{tpu_custom_call.1} parent=1 // pred_check
      _
    $region35: #{tpu_custom_call.1} parent=1 // pred_check_branch
      %144 = sbr.rel (0) target = $region37
    $region36: #{tpu_custom_call.1} parent=1 // pred_region
      %s146 = ssub.s32 16, 16
      %147 = vsyncadd [#allocation4], %s146
      %150 = dma.smem_to_hbm [#allocation8], 16, %s3, [#allocation4]
    $region37: #{tpu_custom_call.1} parent=1 // pred_fallthru
      _
    // Predicated region
    $region38: #{tpu_custom_call.1} parent=1 // pred_check
      _
    $region39: #{tpu_custom_call.1} parent=1 // pred_check_branch
      %152 = sbr.rel (0) target = $region41
    $region40: #{tpu_custom_call.1} parent=1 // pred_region
      %153 = dma.done [#allocation4], 16
    $region41: #{tpu_custom_call.1} parent=1 // pred_fallthru
      _
    %154 = sfence
    %155 = vsyncpa [#allocation3], 1
    %156 = vsyncpa [#allocation6], 1
    %157 = vsyncpa [#allocation4], 1

</llo_original>
